<compile_context>
chip_gen: v7x
topology: tpu7x:2x2x1
jax: 0.10.0
libtpu: 0.0.40
codegen_flags: <defaults>
</compile_context>

<pallas_src>
import math
from functools import partial

import jax
import jax.numpy as jnp
from jax import lax
from jax.experimental import pallas as pl
from jax.experimental.pallas import tpu as pltpu

_MiB = 1024 * 1024


def _full_attention_kernel(q_ref, k_ref, v_ref, o_ref, a_ref=None, *,
                           scale, heads, e_dim, d_dim):
    # q_ref: (1, TL, H*E)  k_ref: (1, S, H*E)  v_ref: (1, S, H*D)
    # o_ref: (1, TL, H*D)  a_ref: (1, H, TL, S) or None
    #
    # H is small; a static unroll keeps every slice static (lane-contiguous,
    # full sublanes).  Each head's (TL, S) f32 temporaries are consumed by its
    # own a_ref store / second matmul before the next head, so the live set
    # stays ~one head plus the (TL, D) per-head outputs gathered below.
    outs = []
    for h in range(heads):
        e_sl = slice(h * e_dim, (h + 1) * e_dim)
        d_sl = slice(h * d_dim, (h + 1) * d_dim)

        # Apply the softmax scale to q (TL*E muls) instead of the (TL,S) f32
        # score matrix (S/E-times fewer VALU multiplies, one less temporary).
        q = q_ref[0, :, e_sl] * scale        # (TL, E), native dtype
        k = k_ref[0, :, e_sl]                # (S, E)
        v = v_ref[0, :, d_sl]                # (S, D)

        # scores[l, s] = sum_e q[l, e] * k[s, e]   (MXU, f32 accumulation)
        scores = lax.dot_general(
            q, k,
            dimension_numbers=(((1,), (1,)), ((), ())),
            preferred_element_type=jnp.float32,
        )                                    # (TL, S) f32

        # Numerically stable softmax over S, kept in f32.
        m = jnp.max(scores, axis=-1, keepdims=True)
        p = jnp.exp(scores - m)
        denom = jnp.sum(p, axis=-1, keepdims=True)
        inv = pl.reciprocal(denom, approx=True)     # EUP slot (nearly free)
        inv = inv * (2.0 - denom * inv)             # one Newton step -> ~f32 exact
        attn = p * inv                              # (TL, S) f32

        # TODO(synk): attention_dropout (p=0.1) is identity in eval mode;
        # training-time dropout (pltpu.prng_random_bits mask) not implemented.

        if a_ref is not None:
            # Full (TL, S) lane-dense store into the (1, H, TL, S) block.
            a_ref[0, h] = attn.astype(a_ref.dtype)

        # V[l, d] = sum_s attn[l, s] * v[s, d]   (MXU, f32 accumulation)
        out = jnp.dot(attn.astype(v.dtype), v, preferred_element_type=jnp.float32)
        outs.append(out.astype(o_ref.dtype))

    # One lane-dense, unmasked store of the whole (TL, H*D) tile.
    o_ref[0, :, :] = jnp.concatenate(outs, axis=-1) if heads > 1 else outs[0]


def _vmem_capacity_bytes():
    """Physical VMEM per TensorCore; conservative 64 MiB (v7x) if unknown."""
    try:
        return int(pltpu.get_tpu_info().vmem_capacity_bytes)
    except Exception:
        return 64 * _MiB


def _step_vmem_bytes(tl, S, H, E, D, item, a_item, output_attention):
    """Per-grid-step VMEM working set estimate (double-buffered blocks plus the
    f32 softmax scratch for one head).  The A out-block dominates for big S."""
    b = 2 * tl * H * E * item            # Q block (double-buffered)
    b += 2 * S * H * E * item            # K block (index only changes with B)
    b += 2 * S * H * D * item            # V block
    b += 2 * tl * H * D * item           # V-out block (double-buffered)
    if output_attention:
        b += 2 * H * tl * S * a_item     # A block -- dominant VMEM/HBM term
    b += 3 * tl * S * 4                  # f32 scores/p/attn live for one head
    return b
    # TODO(synk): pipeline_mode=pl.Buffered(1) on the K/V specs (they only
    # change with B) and an S grid axis with online-softmax accumulation would
    # cut this further for long sequences on v7x's 64 MiB VMEM.


def _pick_l_tile(L, B, budget_bytes, step_bytes_fn):
    """Largest MXU-friendly L tile whose working set fits the VMEM budget."""
    candidates = [t for t in (512, 384, 256, 128, 64, 32, 16, 8) if t < L]
    if L <= 1024:
        candidates.insert(0, L)          # full-L block when it is small enough
    tl = None
    for t in candidates:
        if step_bytes_fn(t) <= budget_bytes:
            tl = t
            break
    if tl is None:
        tl = candidates[-1]              # smallest tile; vmem_limit raised below
    # v7x has 2 TensorCores: when B == 1 make sure the (parallel) L axis has at
    # least 2 steps so both cores get work.  K/V residency still holds per core.
    if B == 1 and tl >= L and L > 8:
        smaller = [t for t in candidates if t < L]
        tl = smaller[0] if smaller else max(8, ((L + 1) // 2 + 7) // 8 * 8)
    return tl


def full_attention(queries, keys, values, scale=None, output_attention=True):
    """queries: (B, L, H, E), keys: (B, S, H, E), values: (B, S, H, D).

    Returns (V, A) with V: (B, L, H, D), A: (B, H, L, S) (or None), matching
    the PyTorch FullAttention forward in eval mode.
    """
    B, L, H, E = queries.shape
    _, S, _, D = values.shape
    scale = scale if scale is not None else 1.0 / math.sqrt(E)

    # Free reshapes (arrays are contiguous): fold H into the lane axis.
    q2 = queries.reshape(B, L, H * E)
    k2 = keys.reshape(B, S, H * E)
    v2 = values.reshape(B, S, H * D)

    # A is emitted in the input dtype (halves its writeback for bf16 inputs);
    # intentionally looser than a pure-f32 reference for bf16.
    a_dtype = queries.dtype
    item = jnp.dtype(queries.dtype).itemsize
    a_item = jnp.dtype(a_dtype).itemsize

    cap = _vmem_capacity_bytes()                 # 64 MiB v7x, 128 MiB v5e/v6e
    headroom = 4 * _MiB
    budget = (cap - headroom) * 4 // 5           # 25% slack for compiler temps
    step_fn = lambda t: _step_vmem_bytes(t, S, H, E, D, item, a_item,
                                         output_attention)
    TL = _pick_l_tile(L, B, budget, step_fn)

    # Scoped-VMEM default is 16 MiB (v5e) / 32 MiB (v6e/v7x); raise it whenever
    # we might exceed the smallest default, but never above physical VMEM.
    need = step_fn(TL) * 5 // 4
    vmem_limit = None
    if need > 12 * _MiB:
        vmem_limit = int(min(max(need, 32 * _MiB), cap - headroom))

    grid = (B, pl.cdiv(L, TL))       # L innermost -> K/V blocks stay resident

    in_specs = [
        pl.BlockSpec((1, TL, H * E), lambda b, l: (b, l, 0)),
        pl.BlockSpec((1, S, H * E), lambda b, l: (b, 0, 0)),
        pl.BlockSpec((1, S, H * D), lambda b, l: (b, 0, 0)),
    ]
    v_shape = jax.ShapeDtypeStruct((B, L, H * D), queries.dtype)
    v_spec = pl.BlockSpec((1, TL, H * D), lambda b, l: (b, l, 0))

    if output_attention:
        out_shape = (v_shape, jax.ShapeDtypeStruct((B, H, L, S), a_dtype))
        out_specs = (v_spec, pl.BlockSpec((1, H, TL, S), lambda b, l: (b, 0, l, 0)))
    else:
        out_shape = v_shape
        out_specs = v_spec

    kernel = partial(_full_attention_kernel, scale=scale, heads=H,
                     e_dim=E, d_dim=D)

    result = pl.pallas_call(
        kernel,
        out_shape=out_shape,
        grid_spec=pltpu.PrefetchScalarGridSpec(
            num_scalar_prefetch=0,
            grid=grid,
            in_specs=in_specs,
            out_specs=out_specs,
        ),
        compiler_params=pltpu.CompilerParams(
            dimension_semantics=("parallel", "parallel"),
            vmem_limit_bytes=vmem_limit,
        ),
    )(q2, k2, v2)

    if output_attention:
        v_out, attn = result
    else:
        v_out, attn = result, None
    return v_out.reshape(B, L, H, D), attn


def _reference(queries, keys, values, scale=None):
    B, L, H, E = queries.shape
    scale = scale if scale is not None else 1.0 / math.sqrt(E)
    scores = jnp.einsum('blhe,bshe->bhls', queries, keys)
    A = jax.nn.softmax(scale * scores, axis=-1)
    V = jnp.einsum('bhls,bshd->blhd', A, values)
    return V, A


if __name__ == "__main__":
    key = jax.random.PRNGKey(0)
    B, L, S, H, E, D = 2, 8, 8, 4, 32, 32
    kq, kk, kv = jax.random.split(key, 3)
    queries = jax.random.normal(kq, (B, L, H, E), dtype=jnp.float32)
    keys = jax.random.normal(kk, (B, S, H, E), dtype=jnp.float32)
    values = jax.random.normal(kv, (B, S, H, D), dtype=jnp.float32)

    V, A = full_attention(queries, keys, values)
    V = jax.block_until_ready(V)
    A = jax.block_until_ready(A)

    V_ref, A_ref = _reference(queries, keys, values)
    assert V.shape == (B, L, H, D) and A.shape == (B, H, L, S)
    assert jnp.allclose(V, V_ref, atol=1e-4, rtol=1e-4)
    assert jnp.allclose(A, A_ref, atol=1e-4, rtol=1e-4)

    # Flash-style path without the A writeback (output_attention=False).
    V2, A2 = full_attention(queries, keys, values, output_attention=False)
    V2 = jax.block_until_ready(V2)
    assert A2 is None
    assert jnp.allclose(V2, V_ref, atol=1e-4, rtol=1e-4)

    print("KERNEL_OK")
</pallas_src>

<mosaic_0001>
module attributes {stable_mosaic.version = 11 : i64} {
  func.func @_full_attention_kernel(%arg0: i32, %arg1: i32, %arg2: memref<1x8x128xf32, #tpu.memory_space<vmem>>, %arg3: memref<1x8x128xf32, #tpu.memory_space<vmem>>, %arg4: memref<1x8x128xf32, #tpu.memory_space<vmem>>, %arg5: memref<1x8x128xf32, #tpu.memory_space<vmem>>, %arg6: memref<1x4x8x8xf32, #tpu.memory_space<vmem>>) attributes {dimension_semantics = [#tpu.dimension_semantics<parallel>, #tpu.dimension_semantics<parallel>], iteration_bounds = array<i64: 2, 1>, scalar_prefetch = 0 : i64, scratch_operands = 0 : i64, tpu.core_type = #tpu.core_type<tc>, window_params = [{transform_indices = @transform_0, window_bounds = array<i64: 1, 8, 128>}, {transform_indices = @transform_1, window_bounds = array<i64: 1, 8, 128>}, {transform_indices = @transform_2, window_bounds = array<i64: 1, 8, 128>}, {transform_indices = @transform_3, window_bounds = array<i64: 1, 8, 128>}, {transform_indices = @transform_4, window_bounds = array<i64: 1, 4, 8, 8>}]} {
    %c0 = arith.constant 0 : index
    %c0_0 = arith.constant 0 : index
    %c0_1 = arith.constant 0 : index
    %0 = vector.load %arg2[%c0, %c0_0, %c0_1] : memref<1x8x128xf32, #tpu.memory_space<vmem>>, vector<1x8x32xf32>
    %1 = vector.shape_cast %0 : vector<1x8x32xf32> to vector<8x32xf32>
    %cst = arith.constant 0.176776692 : f32
    %2 = vector.broadcast %cst : f32 to vector<8x32xf32>
    %3 = arith.mulf %1, %2 : vector<8x32xf32>
    %c0_2 = arith.constant 0 : index
    %c0_3 = arith.constant 0 : index
    %c0_4 = arith.constant 0 : index
    %4 = vector.load %arg3[%c0_2, %c0_3, %c0_4] : memref<1x8x128xf32, #tpu.memory_space<vmem>>, vector<1x8x32xf32>
    %5 = vector.shape_cast %4 : vector<1x8x32xf32> to vector<8x32xf32>
    %c0_5 = arith.constant 0 : index
    %c0_6 = arith.constant 0 : index
    %c0_7 = arith.constant 0 : index
    %6 = vector.load %arg4[%c0_5, %c0_6, %c0_7] : memref<1x8x128xf32, #tpu.memory_space<vmem>>, vector<1x8x32xf32>
    %7 = vector.shape_cast %6 : vector<1x8x32xf32> to vector<8x32xf32>
    %cst_8 = arith.constant dense<0.000000e+00> : vector<8x8xf32>
    %8 = tpu.matmul %3, %5, %cst_8 {dimension_numbers = #tpu.dot_dimension_numbers<[1], [1], [0], [0], [0, 0, 1, 0], [], []>} : vector<8x32xf32>, vector<8x32xf32>, vector<8x8xf32> -> vector<8x8xf32>
    %cst_9 = arith.constant dense<0xFF800000> : vector<8xf32>
    %9 = vector.multi_reduction <maximumf>, %8, %cst_9 [1] : vector<8x8xf32> to vector<8xf32>
    %10 = vector.shape_cast %9 : vector<8xf32> to vector<8x1xf32>
    %11 = vector.broadcast %10 : vector<8x1xf32> to vector<8x8xf32>
    %12 = arith.subf %8, %11 : vector<8x8xf32>
    %13 = math.exp %12 : vector<8x8xf32>
    %cst_10 = arith.constant dense<0.000000e+00> : vector<8xf32>
    %14 = vector.multi_reduction <add>, %13, %cst_10 [1] : vector<8x8xf32> to vector<8xf32>
    %15 = vector.shape_cast %14 : vector<8xf32> to vector<8x1xf32>
    %16 = tpu.reciprocal %15 {approx = true} : vector<8x1xf32> -> vector<8x1xf32>
    %17 = arith.mulf %15, %16 : vector<8x1xf32>
    %cst_11 = arith.constant 2.000000e+00 : f32
    %18 = vector.broadcast %cst_11 : f32 to vector<8x1xf32>
    %19 = arith.subf %18, %17 : vector<8x1xf32>
    %20 = arith.mulf %16, %19 : vector<8x1xf32>
    %21 = vector.broadcast %20 : vector<8x1xf32> to vector<8x8xf32>
    %22 = arith.mulf %13, %21 : vector<8x8xf32>
    %c0_12 = arith.constant 0 : index
    %c0_13 = arith.constant 0 : index
    %c0_14 = arith.constant 0 : index
    %c0_15 = arith.constant 0 : index
    %23 = vector.load %arg6[%c0_12, %c0_13, %c0_14, %c0_15] : memref<1x4x8x8xf32, #tpu.memory_space<vmem>>, vector<1x1x8x8xf32>
    %24 = vector.shape_cast %23 : vector<1x1x8x8xf32> to vector<8x8xf32>
    %25 = vector.shape_cast %22 : vector<8x8xf32> to vector<1x1x8x8xf32>
    tpu.vector_store %arg6[%c0_12, %c0_13, %c0_14, %c0_15], %25 {strides = array<i32>} : memref<1x4x8x8xf32, #tpu.memory_space<vmem>>, vector<1x1x8x8xf32>,
    %cst_16 = arith.constant dense<0.000000e+00> : vector<8x32xf32>
    %26 = tpu.matmul %22, %7, %cst_16 {dimension_numbers = #tpu.dot_dimension_numbers<[1], [0], [0], [1], [0, 0, 1, 1], [], []>} : vector<8x8xf32>, vector<8x32xf32>, vector<8x32xf32> -> vector<8x32xf32>
    %c0_17 = arith.constant 0 : index
    %c0_18 = arith.constant 0 : index
    %c32 = arith.constant 32 : index
    %27 = vector.load %arg2[%c0_17, %c0_18, %c32] : memref<1x8x128xf32, #tpu.memory_space<vmem>>, vector<1x8x32xf32>
    %28 = vector.shape_cast %27 : vector<1x8x32xf32> to vector<8x32xf32>
    %cst_19 = arith.constant 0.176776692 : f32
    %29 = vector.broadcast %cst_19 : f32 to vector<8x32xf32>
    %30 = arith.mulf %28, %29 : vector<8x32xf32>
    %c0_20 = arith.constant 0 : index
    %c0_21 = arith.constant 0 : index
    %c32_22 = arith.constant 32 : index
    %31 = vector.load %arg3[%c0_20, %c0_21, %c32_22] : memref<1x8x128xf32, #tpu.memory_space<vmem>>, vector<1x8x32xf32>
    %32 = vector.shape_cast %31 : vector<1x8x32xf32> to vector<8x32xf32>
    %c0_23 = arith.constant 0 : index
    %c0_24 = arith.constant 0 : index
    %c32_25 = arith.constant 32 : index
    %33 = vector.load %arg4[%c0_23, %c0_24, %c32_25] : memref<1x8x128xf32, #tpu.memory_space<vmem>>, vector<1x8x32xf32>
    %34 = vector.shape_cast %33 : vector<1x8x32xf32> to vector<8x32xf32>
    %cst_26 = arith.constant dense<0.000000e+00> : vector<8x8xf32>
    %35 = tpu.matmul %30, %32, %cst_26 {dimension_numbers = #tpu.dot_dimension_numbers<[1], [1], [0], [0], [0, 0, 1, 0], [], []>} : vector<8x32xf32>, vector<8x32xf32>, vector<8x8xf32> -> vector<8x8xf32>
    %cst_27 = arith.constant dense<0xFF800000> : vector<8xf32>
    %36 = vector.multi_reduction <maximumf>, %35, %cst_27 [1] : vector<8x8xf32> to vector<8xf32>
    %37 = vector.shape_cast %36 : vector<8xf32> to vector<8x1xf32>
    %38 = vector.broadcast %37 : vector<8x1xf32> to vector<8x8xf32>
    %39 = arith.subf %35, %38 : vector<8x8xf32>
    %40 = math.exp %39 : vector<8x8xf32>
    %cst_28 = arith.constant dense<0.000000e+00> : vector<8xf32>
    %41 = vector.multi_reduction <add>, %40, %cst_28 [1] : vector<8x8xf32> to vector<8xf32>
    %42 = vector.shape_cast %41 : vector<8xf32> to vector<8x1xf32>
    %43 = tpu.reciprocal %42 {approx = true} : vector<8x1xf32> -> vector<8x1xf32>
    %44 = arith.mulf %42, %43 : vector<8x1xf32>
    %cst_29 = arith.constant 2.000000e+00 : f32
    %45 = vector.broadcast %cst_29 : f32 to vector<8x1xf32>
    %46 = arith.subf %45, %44 : vector<8x1xf32>
    %47 = arith.mulf %43, %46 : vector<8x1xf32>
    %48 = vector.broadcast %47 : vector<8x1xf32> to vector<8x8xf32>
    %49 = arith.mulf %40, %48 : vector<8x8xf32>
    %c0_30 = arith.constant 0 : index
    %c1 = arith.constant 1 : index
    %c0_31 = arith.constant 0 : index
    %c0_32 = arith.constant 0 : index
    %50 = vector.load %arg6[%c0_30, %c1, %c0_31, %c0_32] : memref<1x4x8x8xf32, #tpu.memory_space<vmem>>, vector<1x1x8x8xf32>
    %51 = vector.shape_cast %50 : vector<1x1x8x8xf32> to vector<8x8xf32>
    %52 = vector.shape_cast %49 : vector<8x8xf32> to vector<1x1x8x8xf32>
    tpu.vector_store %arg6[%c0_30, %c1, %c0_31, %c0_32], %52 {strides = array<i32>} : memref<1x4x8x8xf32, #tpu.memory_space<vmem>>, vector<1x1x8x8xf32>,
    %cst_33 = arith.constant dense<0.000000e+00> : vector<8x32xf32>
    %53 = tpu.matmul %49, %34, %cst_33 {dimension_numbers = #tpu.dot_dimension_numbers<[1], [0], [0], [1], [0, 0, 1, 1], [], []>} : vector<8x8xf32>, vector<8x32xf32>, vector<8x32xf32> -> vector<8x32xf32>
    %c0_34 = arith.constant 0 : index
    %c0_35 = arith.constant 0 : index
    %c64 = arith.constant 64 : index
    %54 = vector.load %arg2[%c0_34, %c0_35, %c64] : memref<1x8x128xf32, #tpu.memory_space<vmem>>, vector<1x8x32xf32>
    %55 = vector.shape_cast %54 : vector<1x8x32xf32> to vector<8x32xf32>
    %cst_36 = arith.constant 0.176776692 : f32
    %56 = vector.broadcast %cst_36 : f32 to vector<8x32xf32>
    %57 = arith.mulf %55, %56 : vector<8x32xf32>
    %c0_37 = arith.constant 0 : index
    %c0_38 = arith.constant 0 : index
    %c64_39 = arith.constant 64 : index
    %58 = vector.load %arg3[%c0_37, %c0_38, %c64_39] : memref<1x8x128xf32, #tpu.memory_space<vmem>>, vector<1x8x32xf32>
    %59 = vector.shape_cast %58 : vector<1x8x32xf32> to vector<8x32xf32>
    %c0_40 = arith.constant 0 : index
    %c0_41 = arith.constant 0 : index
    %c64_42 = arith.constant 64 : index
    %60 = vector.load %arg4[%c0_40, %c0_41, %c64_42] : memref<1x8x128xf32, #tpu.memory_space<vmem>>, vector<1x8x32xf32>
    %61 = vector.shape_cast %60 : vector<1x8x32xf32> to vector<8x32xf32>
    %cst_43 = arith.constant dense<0.000000e+00> : vector<8x8xf32>
    %62 = tpu.matmul %57, %59, %cst_43 {dimension_numbers = #tpu.dot_dimension_numbers<[1], [1], [0], [0], [0, 0, 1, 0], [], []>} : vector<8x32xf32>, vector<8x32xf32>, vector<8x8xf32> -> vector<8x8xf32>
    %cst_44 = arith.constant dense<0xFF800000> : vector<8xf32>
    %63 = vector.multi_reduction <maximumf>, %62, %cst_44 [1] : vector<8x8xf32> to vector<8xf32>
    %64 = vector.shape_cast %63 : vector<8xf32> to vector<8x1xf32>
    %65 = vector.broadcast %64 : vector<8x1xf32> to vector<8x8xf32>
    %66 = arith.subf %62, %65 : vector<8x8xf32>
    %67 = math.exp %66 : vector<8x8xf32>
    %cst_45 = arith.constant dense<0.000000e+00> : vector<8xf32>
    %68 = vector.multi_reduction <add>, %67, %cst_45 [1] : vector<8x8xf32> to vector<8xf32>
    %69 = vector.shape_cast %68 : vector<8xf32> to vector<8x1xf32>
    %70 = tpu.reciprocal %69 {approx = true} : vector<8x1xf32> -> vector<8x1xf32>
    %71 = arith.mulf %69, %70 : vector<8x1xf32>
    %cst_46 = arith.constant 2.000000e+00 : f32
    %72 = vector.broadcast %cst_46 : f32 to vector<8x1xf32>
    %73 = arith.subf %72, %71 : vector<8x1xf32>
    %74 = arith.mulf %70, %73 : vector<8x1xf32>
    %75 = vector.broadcast %74 : vector<8x1xf32> to vector<8x8xf32>
    %76 = arith.mulf %67, %75 : vector<8x8xf32>
    %c0_47 = arith.constant 0 : index
    %c2 = arith.constant 2 : index
    %c0_48 = arith.constant 0 : index
    %c0_49 = arith.constant 0 : index
    %77 = vector.load %arg6[%c0_47, %c2, %c0_48, %c0_49] : memref<1x4x8x8xf32, #tpu.memory_space<vmem>>, vector<1x1x8x8xf32>
    %78 = vector.shape_cast %77 : vector<1x1x8x8xf32> to vector<8x8xf32>
    %79 = vector.shape_cast %76 : vector<8x8xf32> to vector<1x1x8x8xf32>
    tpu.vector_store %arg6[%c0_47, %c2, %c0_48, %c0_49], %79 {strides = array<i32>} : memref<1x4x8x8xf32, #tpu.memory_space<vmem>>, vector<1x1x8x8xf32>,
    %cst_50 = arith.constant dense<0.000000e+00> : vector<8x32xf32>
    %80 = tpu.matmul %76, %61, %cst_50 {dimension_numbers = #tpu.dot_dimension_numbers<[1], [0], [0], [1], [0, 0, 1, 1], [], []>} : vector<8x8xf32>, vector<8x32xf32>, vector<8x32xf32> -> vector<8x32xf32>
    %c0_51 = arith.constant 0 : index
    %c0_52 = arith.constant 0 : index
    %c96 = arith.constant 96 : index
    %81 = vector.load %arg2[%c0_51, %c0_52, %c96] : memref<1x8x128xf32, #tpu.memory_space<vmem>>, vector<1x8x32xf32>
    %82 = vector.shape_cast %81 : vector<1x8x32xf32> to vector<8x32xf32>
    %cst_53 = arith.constant 0.176776692 : f32
    %83 = vector.broadcast %cst_53 : f32 to vector<8x32xf32>
    %84 = arith.mulf %82, %83 : vector<8x32xf32>
    %c0_54 = arith.constant 0 : index
    %c0_55 = arith.constant 0 : index
    %c96_56 = arith.constant 96 : index
    %85 = vector.load %arg3[%c0_54, %c0_55, %c96_56] : memref<1x8x128xf32, #tpu.memory_space<vmem>>, vector<1x8x32xf32>
    %86 = vector.shape_cast %85 : vector<1x8x32xf32> to vector<8x32xf32>
    %c0_57 = arith.constant 0 : index
    %c0_58 = arith.constant 0 : index
    %c96_59 = arith.constant 96 : index
    %87 = vector.load %arg4[%c0_57, %c0_58, %c96_59] : memref<1x8x128xf32, #tpu.memory_space<vmem>>, vector<1x8x32xf32>
    %88 = vector.shape_cast %87 : vector<1x8x32xf32> to vector<8x32xf32>
    %cst_60 = arith.constant dense<0.000000e+00> : vector<8x8xf32>
    %89 = tpu.matmul %84, %86, %cst_60 {dimension_numbers = #tpu.dot_dimension_numbers<[1], [1], [0], [0], [0, 0, 1, 0], [], []>} : vector<8x32xf32>, vector<8x32xf32>, vector<8x8xf32> -> vector<8x8xf32>
    %cst_61 = arith.constant dense<0xFF800000> : vector<8xf32>
    %90 = vector.multi_reduction <maximumf>, %89, %cst_61 [1] : vector<8x8xf32> to vector<8xf32>
    %91 = vector.shape_cast %90 : vector<8xf32> to vector<8x1xf32>
    %92 = vector.broadcast %91 : vector<8x1xf32> to vector<8x8xf32>
    %93 = arith.subf %89, %92 : vector<8x8xf32>
    %94 = math.exp %93 : vector<8x8xf32>
    %cst_62 = arith.constant dense<0.000000e+00> : vector<8xf32>
    %95 = vector.multi_reduction <add>, %94, %cst_62 [1] : vector<8x8xf32> to vector<8xf32>
    %96 = vector.shape_cast %95 : vector<8xf32> to vector<8x1xf32>
    %97 = tpu.reciprocal %96 {approx = true} : vector<8x1xf32> -> vector<8x1xf32>
    %98 = arith.mulf %96, %97 : vector<8x1xf32>
    %cst_63 = arith.constant 2.000000e+00 : f32
    %99 = vector.broadcast %cst_63 : f32 to vector<8x1xf32>
    %100 = arith.subf %99, %98 : vector<8x1xf32>
    %101 = arith.mulf %97, %100 : vector<8x1xf32>
    %102 = vector.broadcast %101 : vector<8x1xf32> to vector<8x8xf32>
    %103 = arith.mulf %94, %102 : vector<8x8xf32>
    %c0_64 = arith.constant 0 : index
    %c3 = arith.constant 3 : index
    %c0_65 = arith.constant 0 : index
    %c0_66 = arith.constant 0 : index
    %104 = vector.load %arg6[%c0_64, %c3, %c0_65, %c0_66] : memref<1x4x8x8xf32, #tpu.memory_space<vmem>>, vector<1x1x8x8xf32>
    %105 = vector.shape_cast %104 : vector<1x1x8x8xf32> to vector<8x8xf32>
    %106 = vector.shape_cast %103 : vector<8x8xf32> to vector<1x1x8x8xf32>
    tpu.vector_store %arg6[%c0_64, %c3, %c0_65, %c0_66], %106 {strides = array<i32>} : memref<1x4x8x8xf32, #tpu.memory_space<vmem>>, vector<1x1x8x8xf32>,
    %cst_67 = arith.constant dense<0.000000e+00> : vector<8x32xf32>
    %107 = tpu.matmul %103, %88, %cst_67 {dimension_numbers = #tpu.dot_dimension_numbers<[1], [0], [0], [1], [0, 0, 1, 1], [], []>} : vector<8x8xf32>, vector<8x32xf32>, vector<8x32xf32> -> vector<8x32xf32>
    %108 = tpu.concatenate %26, %53, %80, %107 in 1 : vector<8x32xf32>, vector<8x32xf32>, vector<8x32xf32>, vector<8x32xf32> -> vector<8x128xf32>
    %c0_68 = arith.constant 0 : index
    %c0_69 = arith.constant 0 : index
    %c0_70 = arith.constant 0 : index
    %109 = vector.load %arg5[%c0_68, %c0_69, %c0_70] : memref<1x8x128xf32, #tpu.memory_space<vmem>>, vector<1x8x128xf32>
    %110 = vector.shape_cast %109 : vector<1x8x128xf32> to vector<8x128xf32>
    %111 = vector.shape_cast %108 : vector<8x128xf32> to vector<1x8x128xf32>
    tpu.vector_store %arg5[%c0_68, %c0_69, %c0_70], %111 {strides = array<i32>} : memref<1x8x128xf32, #tpu.memory_space<vmem>>, vector<1x8x128xf32>,
    return
  }
  func.func @transform_0(%arg0: i32, %arg1: i32) -> (i32, i32, i32) {
    %c0_i32 = arith.constant 0 : i32
    %c0_i32_0 = arith.constant 0 : i32
    return %arg0, %arg1, %c0_i32 : i32, i32, i32
  }
  func.func @transform_1(%arg0: i32, %arg1: i32) -> (i32, i32, i32) {
    %c0_i32 = arith.constant 0 : i32
    %c0_i32_0 = arith.constant 0 : i32
    %c0_i32_1 = arith.constant 0 : i32
    return %arg0, %c0_i32, %c0_i32_0 : i32, i32, i32
  }
  func.func @transform_2(%arg0: i32, %arg1: i32) -> (i32, i32, i32) {
    %c0_i32 = arith.constant 0 : i32
    %c0_i32_0 = arith.constant 0 : i32
    %c0_i32_1 = arith.constant 0 : i32
    return %arg0, %c0_i32, %c0_i32_0 : i32, i32, i32
  }
  func.func @transform_3(%arg0: i32, %arg1: i32) -> (i32, i32, i32) {
    %c0_i32 = arith.constant 0 : i32
    %c0_i32_0 = arith.constant 0 : i32
    return %arg0, %arg1, %c0_i32 : i32, i32, i32
  }
  func.func @transform_4(%arg0: i32, %arg1: i32) -> (i32, i32, i32, i32) {
    %c0_i32 = arith.constant 0 : i32
    %c0_i32_0 = arith.constant 0 : i32
    %c0_i32_1 = arith.constant 0 : i32
    return %arg0, %c0_i32, %arg1, %c0_i32_0 : i32, i32, i32, i32
  }
}

</mosaic_0001>

<llo_original>
// kernel: tpu_custom_call.1
$region0: #{tpu_custom_call.1}
  #allocation0 [shape = 'u32[]', space=smem, size = 0x4, offset = 0x4, fixed_abs, tag = 'smem constant byte address 0x4 - core index']
  #allocation1 [shape = 'u32[144,128]{1,0:T(1,128)}', space=vmem, size = 0x12000, scoped, tag = 'internal scratch']
  %s0 = inlined_call_operand.hbm [shape: f32[2,8,128], index: 0, kind: input, shape index: {}]
  %s1 = inlined_call_operand.hbm [shape: f32[2,8,128], index: 1, kind: input, shape index: {}]
  %s2 = inlined_call_operand.hbm [shape: f32[2,8,128], index: 2, kind: input, shape index: {}]
  %s3 = inlined_call_operand.hbm [shape: f32[2,8,128], index: 3, kind: output, shape index: {0}]
  %s4 = inlined_call_operand.hbm [shape: f32[2,4,8,8], index: 4, kind: output, shape index: {1}]
  %5 = xla_tuple %s3, %s4
  %s6 = sld [smem:[#allocation0]]
  $region65: #{tpu_custom_call.1} parent=0
    _
  %s8 = ssub.s32 1, %s6
  %s9 = scalar_select 0, %s8, %s6
  $region1: #{tpu_custom_call.1} parent=0
    #allocation2 [shape = 'u8[8192]{0}', space=vmem, size = 0x2000, scoped, tag = 'input window, operand 0']
    #allocation3 [shape = 's32[2]{0}', space=sflag, size = 0x8, scoped, tag = 'scoped memory for tpu_custom_call.1']
    #allocation4 [shape = 's32[2]{0}', space=sflag, size = 0x8, scoped, tag = 'scoped memory for tpu_custom_call.1']
    #allocation5 [shape = 'u8[8192]{0}', space=vmem, size = 0x2000, scoped, tag = 'input window, operand 1']
    #allocation6 [shape = 's32[2]{0}', space=sflag, size = 0x8, scoped, tag = 'scoped memory for tpu_custom_call.1']
    #allocation7 [shape = 'u8[8192]{0}', space=vmem, size = 0x2000, scoped, tag = 'input window, operand 2']
    #allocation8 [shape = 'u8[8192]{0}', space=vmem, size = 0x2000, scoped, tag = 'output window, operand 0']
    #allocation9 [shape = 'u8[32768]{0}', space=vmem, size = 0x8000, scoped, tag = 'output window, operand 1']
    #allocation10 [shape = 's32[2]{0}', space=sflag, size = 0x8, scoped, tag = 'scoped memory for tpu_custom_call.1']
    %10 = vsyncpa [#allocation3], 0
    %s11 = scalar_lea.sflag [#allocation3], 1
    %12 = vsyncpa %s11, 0
    %13 = vsyncpa [#allocation6], 0
    %s14 = scalar_lea.sflag [#allocation6], 1
    %15 = vsyncpa %s14, 0
    %16 = vsyncpa [#allocation4], 0
    %s17 = scalar_lea.sflag [#allocation4], 1
    %18 = vsyncpa %s17, 0
    %19 = vsyncpa [#allocation10], 0
    %s20 = scalar_lea.sflag [#allocation10], 1
    %21 = vsyncpa %s20, 0
    loop: start=0, step=1, limit=4
    $region2: #{tpu_custom_call.1} parent=1 // loop_pre_header
      _
    $region3: #{tpu_custom_call.1} parent=1 // loop_header
      %s23 = sphi 0, %s27
      %p24 = scmp.ge.s32.totalorder %s23, 4
      %s30 = sphi 0, %s42
      %s31 = sphi 0, %s38
      %s32 = sphi 0, %s30
      %s33 = sphi 0, %s31
      %s34 = sphi 0, %s32
      %s35 = sphi 0, %s33
      %s47 = sphi 0, %s49
      %s50 = sphi 0, %s47
      %s51 = sphi 0, %s50
      %s67 = sphi 0, %s51
      %s73 = sphi 0, %s75
      %s76 = sphi 0, %s73
      %s77 = sphi 0, %s76
      %s93 = sphi 0, %s77
      %s99 = sphi 0, %s101
      %s102 = sphi 0, %s99
      %s103 = sphi 0, %s102
      %s119 = sphi 0, %s103
      %s127 = sphi 0, %s129
      %s130 = sphi 0, %s127
      %s131 = sphi 0, %s130
      %s147 = sphi 0, %s131
      %s155 = sphi 0, %s157
      %s158 = sphi 0, %s155
      %s159 = sphi 0, %s158
      %s175 = sphi 0, %s159
    $region4: #{tpu_custom_call.1} parent=1 // loop_header_branch
      %26 = sbr.rel (%p24) target = $region8
    $region5: #{tpu_custom_call.1} parent=1 // loop_body
      %s28 = ssub.s32 %s23, 1
      %s29 = ssub.s32 %s23, 2
      %s36 = sadd.s32 1, %s31
      %p37 = scmp.ge.s32.totalorder %s36, 1
      %s38 = scalar_select %p37, 0, %s36
      %s39 = sadd.s32 1, %s30
      %s40 = scalar_select %p37, %s39, %s30
      %p41 = scmp.ge.s32.totalorder %s40, 2
      %s42 = scalar_select %p41, 0, %s40
      %s43 = ssub.s32 %s30, %s42
      %s44 = ssub.s32 %s31, %s38
      %s45 = sor.u32 %s43, %s44
      %p46 = scmp.eq.s32.totalorder %s45, 0
      %s48 = sadd.s32 %s47, 1
      %s49 = scalar_select %p46, %s47, %s48
      %p52 = pneg %p46
      %p53 = scmp.eq.s32.totalorder %s23, 1
      %p54 = por %p52, %p53
      %p55 = scmp.ne.s32.totalorder %s47, %s50
      %p56 = scmp.eq.s32.totalorder %s23, 0
      %p57 = por %p55, %p56
      %p58 = scmp.ne.s32.totalorder %s47, %s50
      %p59 = scmp.eq.s32.totalorder %s28, 1
      %p60 = por %p58, %p59
      %p61 = scmp.ne.s32.totalorder %s50, %s51
      %p62 = scmp.eq.s32.totalorder %s28, 0
      %p63 = por %p61, %p62
      %p64 = scmp.ne.s32.totalorder %s50, %s51
      %p65 = scmp.eq.s32.totalorder %s29, 1
      %p66 = por %p64, %p65
      %p68 = scmp.ne.s32.totalorder %s51, %s67
      %p69 = scmp.eq.s32.totalorder %s29, 0
      %p70 = por %p68, %p69
      %s71 = ssub.s32 %s30, %s42
      %p72 = scmp.eq.s32.totalorder %s71, 0
      %s74 = sadd.s32 %s73, 1
      %s75 = scalar_select %p72, %s73, %s74
      %p78 = pneg %p72
      %p79 = scmp.eq.s32.totalorder %s23, 1
      %p80 = por %p78, %p79
      %p81 = scmp.ne.s32.totalorder %s73, %s76
      %p82 = scmp.eq.s32.totalorder %s23, 0
      %p83 = por %p81, %p82
      %p84 = scmp.ne.s32.totalorder %s73, %s76
      %p85 = scmp.eq.s32.totalorder %s28, 1
      %p86 = por %p84, %p85
      %p87 = scmp.ne.s32.totalorder %s76, %s77
      %p88 = scmp.eq.s32.totalorder %s28, 0
      %p89 = por %p87, %p88
      %p90 = scmp.ne.s32.totalorder %s76, %s77
      %p91 = scmp.eq.s32.totalorder %s29, 1
      %p92 = por %p90, %p91
      %p94 = scmp.ne.s32.totalorder %s77, %s93
      %p95 = scmp.eq.s32.totalorder %s29, 0
      %p96 = por %p94, %p95
      %s97 = ssub.s32 %s30, %s42
      %p98 = scmp.eq.s32.totalorder %s97, 0
      %s100 = sadd.s32 %s99, 1
      %s101 = scalar_select %p98, %s99, %s100
      %p104 = pneg %p98
      %p105 = scmp.eq.s32.totalorder %s23, 1
      %p106 = por %p104, %p105
      %p107 = scmp.ne.s32.totalorder %s99, %s102
      %p108 = scmp.eq.s32.totalorder %s23, 0
      %p109 = por %p107, %p108
      %p110 = scmp.ne.s32.totalorder %s99, %s102
      %p111 = scmp.eq.s32.totalorder %s28, 1
      %p112 = por %p110, %p111
      %p113 = scmp.ne.s32.totalorder %s102, %s103
      %p114 = scmp.eq.s32.totalorder %s28, 0
      %p115 = por %p113, %p114
      %p116 = scmp.ne.s32.totalorder %s102, %s103
      %p117 = scmp.eq.s32.totalorder %s29, 1
      %p118 = por %p116, %p117
      %p120 = scmp.ne.s32.totalorder %s103, %s119
      %p121 = scmp.eq.s32.totalorder %s29, 0
      %p122 = por %p120, %p121
      %s123 = ssub.s32 %s30, %s42
      %s124 = ssub.s32 %s31, %s38
      %s125 = sor.u32 %s123, %s124
      %p126 = scmp.eq.s32.totalorder %s125, 0
      %s128 = sadd.s32 %s127, 1
      %s129 = scalar_select %p126, %s127, %s128
      %p132 = pneg %p126
      %p133 = scmp.eq.s32.totalorder %s23, 1
      %p134 = por %p132, %p133
      %p135 = scmp.ne.s32.totalorder %s127, %s130
      %p136 = scmp.eq.s32.totalorder %s23, 0
      %p137 = por %p135, %p136
      %p138 = scmp.ne.s32.totalorder %s127, %s130
      %p139 = scmp.eq.s32.totalorder %s28, 1
      %p140 = por %p138, %p139
      %p141 = scmp.ne.s32.totalorder %s130, %s131
      %p142 = scmp.eq.s32.totalorder %s28, 0
      %p143 = por %p141, %p142
      %p144 = scmp.ne.s32.totalorder %s130, %s131
      %p145 = scmp.eq.s32.totalorder %s29, 1
      %p146 = por %p144, %p145
      %p148 = scmp.ne.s32.totalorder %s131, %s147
      %p149 = scmp.eq.s32.totalorder %s29, 0
      %p150 = por %p148, %p149
      %s151 = ssub.s32 %s30, %s42
      %s152 = ssub.s32 %s31, %s38
      %s153 = sor.u32 %s151, %s152
      %p154 = scmp.eq.s32.totalorder %s153, 0
      %s156 = sadd.s32 %s155, 1
      %s157 = scalar_select %p154, %s155, %s156
      %p160 = pneg %p154
      %p161 = scmp.eq.s32.totalorder %s23, 1
      %p162 = por %p160, %p161
      %p163 = scmp.ne.s32.totalorder %s155, %s158
      %p164 = scmp.eq.s32.totalorder %s23, 0
      %p165 = por %p163, %p164
      %p166 = scmp.ne.s32.totalorder %s155, %s158
      %p167 = scmp.eq.s32.totalorder %s28, 1
      %p168 = por %p166, %p167
      %p169 = scmp.ne.s32.totalorder %s158, %s159
      %p170 = scmp.eq.s32.totalorder %s28, 0
      %p171 = por %p169, %p170
      %p172 = scmp.ne.s32.totalorder %s158, %s159
      %p173 = scmp.eq.s32.totalorder %s29, 1
      %p174 = por %p172, %p173
      %p176 = scmp.ne.s32.totalorder %s159, %s175
      %p177 = scmp.eq.s32.totalorder %s29, 0
      %p178 = por %p176, %p177
      %p179 = scmp.le.s32.totalorder 1, %s23
      %p180 = scmp.lt.s32.totalorder %s23, 3
      %p181 = pnand %p179, %p180
      %p182 = pneg %p181
      // Predicated region
      $region9: #{tpu_custom_call.1} parent=5 // pred_check
        _
      $region10: #{tpu_custom_call.1} parent=5 // pred_check_branch
        %184 = sbr.rel (%p181) target = $region12
      $region11: #{tpu_custom_call.1} parent=5 // pred_region
        %s185 = ssub.s32 %s23, 1
      $region12: #{tpu_custom_call.1} parent=5 // pred_fallthru
        _
      %p186 = scmp.lt.s32.totalorder %s23, 2
      // Predicated region
      $region13: #{tpu_custom_call.1} parent=5 // pred_check
        %p187 = pneg %p186
      $region14: #{tpu_custom_call.1} parent=5 // pred_check_branch
        %189 = sbr.rel (%p187) target = $region16
      $region15: #{tpu_custom_call.1} parent=5 // pred_region
        // Predicated region
        $region17: #{tpu_custom_call.1} parent=15 // pred_check
          %p190 = pneg %p57
        $region18: #{tpu_custom_call.1} parent=15 // pred_check_branch
          %192 = sbr.rel (%p190) target = $region20
        $region19: #{tpu_custom_call.1} parent=15 // pred_region
          %s193 = sand.u32 %s47, 1
          %s194 = scalar_lea.sflag [#allocation3], %s193
          %s195 = sand.u32 %s47, 1
          %s196 = smul.addr %s195, 8
          %s197 = scalar_lea.vmem [#allocation2], %s196
          %s199 = ssub.s32 128, 128
          %200 = vsyncadd %s194, %s199
          %s201 = sadd.s32 %s31, %s30
          %s202 = smul.addr %s201, 128
          %s203 = scalar_lea.hbm %s0, %s202
          %s205 = sshll.u32 %s197, 4
          %s206 = int_to_ptr.vmem [resolvable:$true] %s205
          %208 = dma.hbm_to_vmem [thread:$0]  %s203, 128, %s206, %s194
        $region20: #{tpu_custom_call.1} parent=15 // pred_fallthru
          _
        // Predicated region
        $region21: #{tpu_custom_call.1} parent=15 // pred_check
          %p209 = pneg %p83
        $region22: #{tpu_custom_call.1} parent=15 // pred_check_branch
          %211 = sbr.rel (%p209) target = $region24
        $region23: #{tpu_custom_call.1} parent=15 // pred_region
          %s212 = sand.u32 %s23, 1
          %s213 = scalar_lea.sflag [#allocation6], %s212
          %s214 = sand.u32 %s73, 1
          %s215 = smul.addr %s214, 8
          %s216 = scalar_lea.vmem [#allocation5], %s215
          %s218 = ssub.s32 128, 128
          %219 = vsyncadd %s213, %s218
          %s220 = smul.addr %s30, 128
          %s221 = scalar_lea.hbm %s1, %s220
          %s223 = sshll.u32 %s216, 4
          %s224 = int_to_ptr.vmem [resolvable:$true] %s223
          %226 = dma.hbm_to_vmem [thread:$0]  %s221, 128, %s224, %s213
        $region24: #{tpu_custom_call.1} parent=15 // pred_fallthru
          _
        // Predicated region
        $region25: #{tpu_custom_call.1} parent=15 // pred_check
          %p227 = pneg %p109
        $region26: #{tpu_custom_call.1} parent=15 // pred_check_branch
          %229 = sbr.rel (%p227) target = $region28
        $region27: #{tpu_custom_call.1} parent=15 // pred_region
          %s230 = sand.u32 %s23, 1
          %s231 = scalar_lea.sflag [#allocation6], %s230
          %s232 = sand.u32 %s99, 1
          %s233 = smul.addr %s232, 8
          %s234 = scalar_lea.vmem [#allocation7], %s233
          %s236 = ssub.s32 128, 128
          %237 = vsyncadd %s231, %s236
          %s238 = smul.addr %s30, 128
          %s239 = scalar_lea.hbm %s2, %s238
          %s241 = sshll.u32 %s234, 4
          %s242 = int_to_ptr.vmem [resolvable:$true] %s241
          %244 = dma.hbm_to_vmem [thread:$0]  %s239, 128, %s242, %s231
        $region28: #{tpu_custom_call.1} parent=15 // pred_fallthru
          _
      $region16: #{tpu_custom_call.1} parent=5 // pred_fallthru
        _
      %p245 = scmp.le.s32.totalorder 1, %s23
      %p246 = scmp.lt.s32.totalorder %s23, 3
      %p247 = pnand %p245, %p246
      %p248 = pneg %p247
      // Predicated region
      $region29: #{tpu_custom_call.1} parent=5 // pred_check
        _
      $region30: #{tpu_custom_call.1} parent=5 // pred_check_branch
        %250 = sbr.rel (%p247) target = $region32
      $region31: #{tpu_custom_call.1} parent=5 // pred_region
        %s251 = ssub.s32 %s23, 1
        %s252 = sand.u32 %s50, 1
        %s253 = scalar_lea.sflag [#allocation3], %s252
        %s254 = sand.u32 %s50, 1
        %s255 = smul.addr %s254, 8
        %s256 = scalar_lea.vmem [#allocation2], %s255
        // Predicated region
        $region33: #{tpu_custom_call.1} parent=31 // pred_check
          %p257 = pneg %p63
        $region34: #{tpu_custom_call.1} parent=31 // pred_check_branch
          %259 = sbr.rel (%p257) target = $region36
        $region35: #{tpu_custom_call.1} parent=31 // pred_region
          %260 = dma.done %s253, 128
        $region36: #{tpu_custom_call.1} parent=31 // pred_fallthru
          _
        %s261 = sand.u32 %s28, 1
        %s262 = scalar_lea.sflag [#allocation6], %s261
        %s263 = sand.u32 %s76, 1
        %s264 = smul.addr %s263, 8
        %s265 = scalar_lea.vmem [#allocation5], %s264
        // Predicated region
        $region37: #{tpu_custom_call.1} parent=31 // pred_check
          %p266 = pneg %p89
        $region38: #{tpu_custom_call.1} parent=31 // pred_check_branch
          %268 = sbr.rel (%p266) target = $region40
        $region39: #{tpu_custom_call.1} parent=31 // pred_region
          %269 = dma.done %s262, 128
        $region40: #{tpu_custom_call.1} parent=31 // pred_fallthru
          _
        %s270 = sand.u32 %s28, 1
        %s271 = scalar_lea.sflag [#allocation6], %s270
        %s272 = sand.u32 %s102, 1
        %s273 = smul.addr %s272, 8
        %s274 = scalar_lea.vmem [#allocation7], %s273
        // Predicated region
        $region41: #{tpu_custom_call.1} parent=31 // pred_check
          %p275 = pneg %p115
        $region42: #{tpu_custom_call.1} parent=31 // pred_check_branch
          %277 = sbr.rel (%p275) target = $region44
        $region43: #{tpu_custom_call.1} parent=31 // pred_region
          %278 = dma.done %s271, 128
        $region44: #{tpu_custom_call.1} parent=31 // pred_fallthru
          _
        %s279 = sand.u32 %s50, 1
        %s280 = scalar_lea.sflag [#allocation3], %s279
        %s281 = sand.u32 %s50, 1
        %s282 = smul.addr %s281, 8
        %s283 = scalar_lea.vmem [#allocation2], %s282
        %p284 = pneg %p63
        %p285 = pneg %p60
        %s286 = sand.u32 %s28, 1
        %s287 = scalar_lea.sflag [#allocation6], %s286
        %s288 = sand.u32 %s76, 1
        %s289 = smul.addr %s288, 8
        %s290 = scalar_lea.vmem [#allocation5], %s289
        %p291 = pneg %p89
        %p292 = pneg %p86
        %s293 = sand.u32 %s28, 1
        %s294 = scalar_lea.sflag [#allocation6], %s293
        %s295 = sand.u32 %s102, 1
        %s296 = smul.addr %s295, 8
        %s297 = scalar_lea.vmem [#allocation7], %s296
        %p298 = pneg %p115
        %p299 = pneg %p112
        %p300 = pneg %p143
        %p301 = pneg %p140
        %s302 = sand.u32 %s130, 1
        %s303 = scalar_lea.sflag [#allocation4], %s302
        %s304 = sand.u32 %s130, 1
        %s305 = smul.addr %s304, 8
        %s306 = scalar_lea.vmem [#allocation8], %s305
        %p307 = pneg %p171
        %p308 = pneg %p168
        %s309 = sand.u32 %s158, 1
        %s310 = scalar_lea.sflag [#allocation10], %s309
        %s311 = sand.u32 %s158, 1
        %s312 = smul.addr %s311, 32
        %s313 = scalar_lea.vmem [#allocation9], %s312
        %v314 = vld [vmem:[%s256] sm:$0xff]
        %v315 = vmul.f32 %v314, 0.17677669
        %v316 = vld [vmem:[%s265] sm:$0xff]
        %v317 = vld [vmem:[%s274] sm:$0xff]
        %vm318 = vcmask 261120
        %v320 = vsel %vm318, %v315, 0
        %v323 = vsel %vm318, %v316, 0
        %325 = vmatprep.subr.mxu0 0.0
        %326 = vmatpush1.xpose.msra.mxu0 %v323
        %327 = vmatprep.subr.mxu0 0.0
        %328 = vmatpush1.xpose.msra.mxu0 0.0
        %329 = vmatprep.subr.mxu0 0.0
        %330 = vmatpush1.xpose.msra.mxu0 0.0
        %331 = vmatprep.subr.mxu0 0.0
        %332 = vmatpush1.xpose.msra.mxu0 0.0
        %333 = vmatprep.subr.mxu0 0.0
        %334 = vmatpush1.xpose.msra.mxu0 0.0
        %335 = vmatprep.subr.mxu0 0.0
        %336 = vmatpush1.xpose.msra.mxu0 0.0
        %337 = vmatprep.subr.mxu0 0.0
        %338 = vmatpush1.xpose.msra.mxu0 0.0
        %339 = vmatprep.subr.mxu0 0.0
        %340 = vmatpush1.xpose.msra.mxu0 0.0
        %341 = vmatprep.subr.mxu0 0.0
        %342 = vmatpush1.xpose.msra.mxu0 0.0
        %343 = vmatprep.subr.mxu0 0.0
        %344 = vmatpush1.xpose.msra.mxu0 0.0
        %345 = vmatprep.subr.mxu0 0.0
        %346 = vmatpush1.xpose.msra.mxu0 0.0
        %347 = vmatprep.subr.mxu0 0.0
        %348 = vmatpush1.xpose.msra.mxu0 0.0
        %349 = vmatprep.subr.mxu0 0.0
        %350 = vmatpush1.xpose.msra.mxu0 0.0
        %351 = vmatprep.subr.mxu0 0.0
        %352 = vmatpush1.xpose.msra.mxu0 0.0
        %353 = vmatprep.subr.mxu0 0.0
        %354 = vmatpush1.xpose.msra.mxu0 0.0
        %355 = vmatprep.subr.mxu0 0.0
        %356 = vmatpush1.xpose.msra.mxu0 0.0
        %357 = vmatprep.subr.mxu0 0.0
        %358 = vmatpush1.xpose.msra.mxu0 0.0
        %359 = vmatprep.subr.mxu0 0.0
        %360 = vmatpush1.xpose.msra.mxu0 0.0
        %361 = vmatprep.subr.mxu0 0.0
        %362 = vmatpush1.xpose.msra.mxu0 0.0
        %363 = vmatprep.subr.mxu0 0.0
        %364 = vmatpush1.xpose.msra.mxu0 0.0
        %365 = vmatprep.subr.mxu0 0.0
        %366 = vmatpush1.xpose.msra.mxu0 0.0
        %367 = vmatprep.subr.mxu0 0.0
        %368 = vmatpush1.xpose.msra.mxu0 0.0
        %369 = vmatprep.subr.mxu0 0.0
        %370 = vmatpush1.xpose.msra.mxu0 0.0
        %371 = vmatprep.subr.mxu0 0.0
        %372 = vmatpush1.xpose.msra.mxu0 0.0
        %373 = vmatprep.subr.mxu0 0.0
        %374 = vmatpush1.xpose.msra.mxu0 0.0
        %375 = vmatprep.subr.mxu0 0.0
        %376 = vmatpush1.xpose.msra.mxu0 0.0
        %377 = vmatprep.subr.mxu0 0.0
        %378 = vmatpush1.xpose.msra.mxu0 0.0
        %379 = vmatprep.subr.mxu0 0.0
        %380 = vmatpush1.xpose.msra.mxu0 0.0
        %381 = vmatprep.subr.mxu0 0.0
        %382 = vmatpush1.xpose.msra.mxu0 0.0
        %383 = vmatprep.subr.mxu0 0.0
        %384 = vmatpush1.xpose.msra.mxu0 0.0
        %385 = vmatprep.subr.mxu0 0.0
        %386 = vmatpush1.xpose.msra.mxu0 0.0
        %387 = vmatprep.subr.mxu0 0.0
        %388 = vmatpush1.xpose.msra.mxu0 0.0
        %389 = vmatprep.mubr.f32.mxu0 0.0
        %390 = vmatmul.mubr.f32.gmra.mrb[0].mxu0 %v320
        %v391 = vpop.f32.mrb[0].mxu0
        %v392 = vadd.f32 0.0, %v391
        %v393 = vpop.f32.mrb[0].mxu0
        %394 = vdwg.mxu0
        %vm395 = vcmask 64512
        %v396 = vsel %vm395, %v392, -inf
        %397 = vmax.xlane.f32.xlu0 %v396
        %v398 = vpop.xlane.xlu0 %397
        %v399 = vsub.f32 %v392, %v398
        %v400 = vmul.f32 %v399, 1.442695
        %v401 = vpow.pop %v400
        %v402 = vsel %vm395, %v401, 0.0
        %403 = vadd.xlane.f32.xlu0 %v402
        %v404 = vpop.xlane.xlu0 %403
        %v405 = vrcp.pop %v404
        %v406 = vmul.f32 %v404, %v405
        %v407 = vsub.f32 2.0, %v406
        %v408 = vmul.f32 %v405, %v407
        %v409 = vmul.f32 %v401, %v408
        %410 = vst.msk [vmem:[%s313] sm:$0xff] %vm395, %v409
        %v412 = vsel %vm395, %v409, 0
        %414 = vmatprep.subr.mxu0 0.0
        %415 = vmatpush1.msra.mxu0 %v317
        %416 = vmatprep.subr.mxu0 0.0
        %417 = vmatpush1.msra.mxu0 0.0
        %418 = vmatprep.subr.mxu0 0.0
        %419 = vmatpush1.msra.mxu0 0.0
        %420 = vmatprep.subr.mxu0 0.0
        %421 = vmatpush1.msra.mxu0 0.0
        %422 = vmatprep.subr.mxu0 0.0
        %423 = vmatpush1.msra.mxu0 0.0
        %424 = vmatprep.subr.mxu0 0.0
        %425 = vmatpush1.msra.mxu0 0.0
        %426 = vmatprep.subr.mxu0 0.0
        %427 = vmatpush1.msra.mxu0 0.0
        %428 = vmatprep.subr.mxu0 0.0
        %429 = vmatpush1.msra.mxu0 0.0
        %430 = vmatprep.subr.mxu0 0.0
        %431 = vmatpush1.msra.mxu0 0.0
        %432 = vmatprep.subr.mxu0 0.0
        %433 = vmatpush1.msra.mxu0 0.0
        %434 = vmatprep.subr.mxu0 0.0
        %435 = vmatpush1.msra.mxu0 0.0
        %436 = vmatprep.subr.mxu0 0.0
        %437 = vmatpush1.msra.mxu0 0.0
        %438 = vmatprep.subr.mxu0 0.0
        %439 = vmatpush1.msra.mxu0 0.0
        %440 = vmatprep.subr.mxu0 0.0
        %441 = vmatpush1.msra.mxu0 0.0
        %442 = vmatprep.subr.mxu0 0.0
        %443 = vmatpush1.msra.mxu0 0.0
        %444 = vmatprep.subr.mxu0 0.0
        %445 = vmatpush1.msra.mxu0 0.0
        %446 = vmatprep.subr.mxu0 0.0
        %447 = vmatpush1.msra.mxu0 0.0
        %448 = vmatprep.subr.mxu0 0.0
        %449 = vmatpush1.msra.mxu0 0.0
        %450 = vmatprep.subr.mxu0 0.0
        %451 = vmatpush1.msra.mxu0 0.0
        %452 = vmatprep.subr.mxu0 0.0
        %453 = vmatpush1.msra.mxu0 0.0
        %454 = vmatprep.subr.mxu0 0.0
        %455 = vmatpush1.msra.mxu0 0.0
        %456 = vmatprep.subr.mxu0 0.0
        %457 = vmatpush1.msra.mxu0 0.0
        %458 = vmatprep.subr.mxu0 0.0
        %459 = vmatpush1.msra.mxu0 0.0
        %460 = vmatprep.subr.mxu0 0.0
        %461 = vmatpush1.msra.mxu0 0.0
        %462 = vmatprep.subr.mxu0 0.0
        %463 = vmatpush1.msra.mxu0 0.0
        %464 = vmatprep.subr.mxu0 0.0
        %465 = vmatpush1.msra.mxu0 0.0
        %466 = vmatprep.subr.mxu0 0.0
        %467 = vmatpush1.msra.mxu0 0.0
        %468 = vmatprep.subr.mxu0 0.0
        %469 = vmatpush1.msra.mxu0 0.0
        %470 = vmatprep.subr.mxu0 0.0
        %471 = vmatpush1.msra.mxu0 0.0
        %472 = vmatprep.subr.mxu0 0.0
        %473 = vmatpush1.msra.mxu0 0.0
        %474 = vmatprep.subr.mxu0 0.0
        %475 = vmatpush1.msra.mxu0 0.0
        %476 = vmatprep.subr.mxu0 0.0
        %477 = vmatpush1.msra.mxu0 0.0
        %478 = vmatprep.mubr.f32.mxu0 0.0
        %479 = vmatmul.mubr.f32.gmra.mrb[0].mxu0 %v412
        %v480 = vpop.f32.mrb[0].mxu0
        %v481 = vadd.f32 0.0, %v480
        %v482 = vpop.f32.mrb[0].mxu0
        %483 = vdwg.mxu0
        %v484 = vld [vmem:[%s256] sm:$0xff]
        %v485 = vmul.f32 %v484, 0.17677669
        %v486 = vld [vmem:[%s265] sm:$0xff]
        %v487 = vld [vmem:[%s274] sm:$0xff]
        %489 = vrot.lane.b32.xlu0 %v485, 96
        %v490 = vpop.permute.xlu0 %489
        %492 = vrot.lane.b32.xlu0 %v486, 96
        %v493 = vpop.permute.xlu0 %492
        %v494 = vsel %vm318, %v490, 0
        %v496 = vsel %vm318, %v493, 0
        %498 = vmatprep.subr.mxu0 0.0
        %499 = vmatpush1.xpose.msra.mxu0 %v496
        %500 = vmatprep.subr.mxu0 0.0
        %501 = vmatpush1.xpose.msra.mxu0 0.0
        %502 = vmatprep.subr.mxu0 0.0
        %503 = vmatpush1.xpose.msra.mxu0 0.0
        %504 = vmatprep.subr.mxu0 0.0
        %505 = vmatpush1.xpose.msra.mxu0 0.0
        %506 = vmatprep.subr.mxu0 0.0
        %507 = vmatpush1.xpose.msra.mxu0 0.0
        %508 = vmatprep.subr.mxu0 0.0
        %509 = vmatpush1.xpose.msra.mxu0 0.0
        %510 = vmatprep.subr.mxu0 0.0
        %511 = vmatpush1.xpose.msra.mxu0 0.0
        %512 = vmatprep.subr.mxu0 0.0
        %513 = vmatpush1.xpose.msra.mxu0 0.0
        %514 = vmatprep.subr.mxu0 0.0
        %515 = vmatpush1.xpose.msra.mxu0 0.0
        %516 = vmatprep.subr.mxu0 0.0
        %517 = vmatpush1.xpose.msra.mxu0 0.0
        %518 = vmatprep.subr.mxu0 0.0
        %519 = vmatpush1.xpose.msra.mxu0 0.0
        %520 = vmatprep.subr.mxu0 0.0
        %521 = vmatpush1.xpose.msra.mxu0 0.0
        %522 = vmatprep.subr.mxu0 0.0
        %523 = vmatpush1.xpose.msra.mxu0 0.0
        %524 = vmatprep.subr.mxu0 0.0
        %525 = vmatpush1.xpose.msra.mxu0 0.0
        %526 = vmatprep.subr.mxu0 0.0
        %527 = vmatpush1.xpose.msra.mxu0 0.0
        %528 = vmatprep.subr.mxu0 0.0
        %529 = vmatpush1.xpose.msra.mxu0 0.0
        %530 = vmatprep.subr.mxu0 0.0
        %531 = vmatpush1.xpose.msra.mxu0 0.0
        %532 = vmatprep.subr.mxu0 0.0
        %533 = vmatpush1.xpose.msra.mxu0 0.0
        %534 = vmatprep.subr.mxu0 0.0
        %535 = vmatpush1.xpose.msra.mxu0 0.0
        %536 = vmatprep.subr.mxu0 0.0
        %537 = vmatpush1.xpose.msra.mxu0 0.0
        %538 = vmatprep.subr.mxu0 0.0
        %539 = vmatpush1.xpose.msra.mxu0 0.0
        %540 = vmatprep.subr.mxu0 0.0
        %541 = vmatpush1.xpose.msra.mxu0 0.0
        %542 = vmatprep.subr.mxu0 0.0
        %543 = vmatpush1.xpose.msra.mxu0 0.0
        %544 = vmatprep.subr.mxu0 0.0
        %545 = vmatpush1.xpose.msra.mxu0 0.0
        %546 = vmatprep.subr.mxu0 0.0
        %547 = vmatpush1.xpose.msra.mxu0 0.0
        %548 = vmatprep.subr.mxu0 0.0
        %549 = vmatpush1.xpose.msra.mxu0 0.0
        %550 = vmatprep.subr.mxu0 0.0
        %551 = vmatpush1.xpose.msra.mxu0 0.0
        %552 = vmatprep.subr.mxu0 0.0
        %553 = vmatpush1.xpose.msra.mxu0 0.0
        %554 = vmatprep.subr.mxu0 0.0
        %555 = vmatpush1.xpose.msra.mxu0 0.0
        %556 = vmatprep.subr.mxu0 0.0
        %557 = vmatpush1.xpose.msra.mxu0 0.0
        %558 = vmatprep.subr.mxu0 0.0
        %559 = vmatpush1.xpose.msra.mxu0 0.0
        %560 = vmatprep.subr.mxu0 0.0
        %561 = vmatpush1.xpose.msra.mxu0 0.0
        %562 = vmatprep.mubr.f32.mxu0 0.0
        %563 = vmatmul.mubr.f32.gmra.mrb[0].mxu0 %v494
        %v564 = vpop.f32.mrb[0].mxu0
        %v565 = vadd.f32 0.0, %v564
        %v566 = vpop.f32.mrb[0].mxu0
        %567 = vdwg.mxu0
        %v568 = vsel %vm395, %v565, -inf
        %569 = vmax.xlane.f32.xlu0 %v568
        %v570 = vpop.xlane.xlu0 %569
        %v571 = vsub.f32 %v565, %v570
        %v572 = vmul.f32 %v571, 1.442695
        %v573 = vpow.pop %v572
        %v574 = vsel %vm395, %v573, 0.0
        %575 = vadd.xlane.f32.xlu0 %v574
        %v576 = vpop.xlane.xlu0 %575
        %v577 = vrcp.pop %v576
        %v578 = vmul.f32 %v576, %v577
        %v579 = vsub.f32 2.0, %v578
        %v580 = vmul.f32 %v577, %v579
        %v581 = vmul.f32 %v573, %v580
        %s582 = scalar_lea.vmem %s313, 8 [#allocation9]
        %583 = vst.msk [vmem:[%s582] sm:$0xff] %vm395, %v581
        %585 = vrot.lane.b32.xlu0 %v487, 96
        %v586 = vpop.permute.xlu0 %585
        %v589 = vsel %vm395, %v581, 0
        %591 = vmatprep.subr.mxu0 0.0
        %592 = vmatpush1.msra.mxu0 %v586
        %593 = vmatprep.subr.mxu0 0.0
        %594 = vmatpush1.msra.mxu0 0.0
        %595 = vmatprep.subr.mxu0 0.0
        %596 = vmatpush1.msra.mxu0 0.0
        %597 = vmatprep.subr.mxu0 0.0
        %598 = vmatpush1.msra.mxu0 0.0
        %599 = vmatprep.subr.mxu0 0.0
        %600 = vmatpush1.msra.mxu0 0.0
        %601 = vmatprep.subr.mxu0 0.0
        %602 = vmatpush1.msra.mxu0 0.0
        %603 = vmatprep.subr.mxu0 0.0
        %604 = vmatpush1.msra.mxu0 0.0
        %605 = vmatprep.subr.mxu0 0.0
        %606 = vmatpush1.msra.mxu0 0.0
        %607 = vmatprep.subr.mxu0 0.0
        %608 = vmatpush1.msra.mxu0 0.0
        %609 = vmatprep.subr.mxu0 0.0
        %610 = vmatpush1.msra.mxu0 0.0
        %611 = vmatprep.subr.mxu0 0.0
        %612 = vmatpush1.msra.mxu0 0.0
        %613 = vmatprep.subr.mxu0 0.0
        %614 = vmatpush1.msra.mxu0 0.0
        %615 = vmatprep.subr.mxu0 0.0
        %616 = vmatpush1.msra.mxu0 0.0
        %617 = vmatprep.subr.mxu0 0.0
        %618 = vmatpush1.msra.mxu0 0.0
        %619 = vmatprep.subr.mxu0 0.0
        %620 = vmatpush1.msra.mxu0 0.0
        %621 = vmatprep.subr.mxu0 0.0
        %622 = vmatpush1.msra.mxu0 0.0
        %623 = vmatprep.subr.mxu0 0.0
        %624 = vmatpush1.msra.mxu0 0.0
        %625 = vmatprep.subr.mxu0 0.0
        %626 = vmatpush1.msra.mxu0 0.0
        %627 = vmatprep.subr.mxu0 0.0
        %628 = vmatpush1.msra.mxu0 0.0
        %629 = vmatprep.subr.mxu0 0.0
        %630 = vmatpush1.msra.mxu0 0.0
        %631 = vmatprep.subr.mxu0 0.0
        %632 = vmatpush1.msra.mxu0 0.0
        %633 = vmatprep.subr.mxu0 0.0
        %634 = vmatpush1.msra.mxu0 0.0
        %635 = vmatprep.subr.mxu0 0.0
        %636 = vmatpush1.msra.mxu0 0.0
        %637 = vmatprep.subr.mxu0 0.0
        %638 = vmatpush1.msra.mxu0 0.0
        %639 = vmatprep.subr.mxu0 0.0
        %640 = vmatpush1.msra.mxu0 0.0
        %641 = vmatprep.subr.mxu0 0.0
        %642 = vmatpush1.msra.mxu0 0.0
        %643 = vmatprep.subr.mxu0 0.0
        %644 = vmatpush1.msra.mxu0 0.0
        %645 = vmatprep.subr.mxu0 0.0
        %646 = vmatpush1.msra.mxu0 0.0
        %647 = vmatprep.subr.mxu0 0.0
        %648 = vmatpush1.msra.mxu0 0.0
        %649 = vmatprep.subr.mxu0 0.0
        %650 = vmatpush1.msra.mxu0 0.0
        %651 = vmatprep.subr.mxu0 0.0
        %652 = vmatpush1.msra.mxu0 0.0
        %653 = vmatprep.subr.mxu0 0.0
        %654 = vmatpush1.msra.mxu0 0.0
        %655 = vmatprep.mubr.f32.mxu0 0.0
        %656 = vmatmul.mubr.f32.gmra.mrb[0].mxu0 %v589
        %v657 = vpop.f32.mrb[0].mxu0
        %v658 = vadd.f32 0.0, %v657
        %v659 = vpop.f32.mrb[0].mxu0
        %660 = vdwg.mxu0
        %v661 = vld [vmem:[%s256] sm:$0xff]
        %v662 = vmul.f32 %v661, 0.17677669
        %v663 = vld [vmem:[%s265] sm:$0xff]
        %v664 = vld [vmem:[%s274] sm:$0xff]
        %666 = vrot.lane.b32.xlu0 %v662, 64
        %v667 = vpop.permute.xlu0 %666
        %669 = vrot.lane.b32.xlu0 %v663, 64
        %v670 = vpop.permute.xlu0 %669
        %v671 = vsel %vm318, %v667, 0
        %v673 = vsel %vm318, %v670, 0
        %675 = vmatprep.subr.mxu0 0.0
        %676 = vmatpush1.xpose.msra.mxu0 %v673
        %677 = vmatprep.subr.mxu0 0.0
        %678 = vmatpush1.xpose.msra.mxu0 0.0
        %679 = vmatprep.subr.mxu0 0.0
        %680 = vmatpush1.xpose.msra.mxu0 0.0
        %681 = vmatprep.subr.mxu0 0.0
        %682 = vmatpush1.xpose.msra.mxu0 0.0
        %683 = vmatprep.subr.mxu0 0.0
        %684 = vmatpush1.xpose.msra.mxu0 0.0
        %685 = vmatprep.subr.mxu0 0.0
        %686 = vmatpush1.xpose.msra.mxu0 0.0
        %687 = vmatprep.subr.mxu0 0.0
        %688 = vmatpush1.xpose.msra.mxu0 0.0
        %689 = vmatprep.subr.mxu0 0.0
        %690 = vmatpush1.xpose.msra.mxu0 0.0
        %691 = vmatprep.subr.mxu0 0.0
        %692 = vmatpush1.xpose.msra.mxu0 0.0
        %693 = vmatprep.subr.mxu0 0.0
        %694 = vmatpush1.xpose.msra.mxu0 0.0
        %695 = vmatprep.subr.mxu0 0.0
        %696 = vmatpush1.xpose.msra.mxu0 0.0
        %697 = vmatprep.subr.mxu0 0.0
        %698 = vmatpush1.xpose.msra.mxu0 0.0
        %699 = vmatprep.subr.mxu0 0.0
        %700 = vmatpush1.xpose.msra.mxu0 0.0
        %701 = vmatprep.subr.mxu0 0.0
        %702 = vmatpush1.xpose.msra.mxu0 0.0
        %703 = vmatprep.subr.mxu0 0.0
        %704 = vmatpush1.xpose.msra.mxu0 0.0
        %705 = vmatprep.subr.mxu0 0.0
        %706 = vmatpush1.xpose.msra.mxu0 0.0
        %707 = vmatprep.subr.mxu0 0.0
        %708 = vmatpush1.xpose.msra.mxu0 0.0
        %709 = vmatprep.subr.mxu0 0.0
        %710 = vmatpush1.xpose.msra.mxu0 0.0
        %711 = vmatprep.subr.mxu0 0.0
        %712 = vmatpush1.xpose.msra.mxu0 0.0
        %713 = vmatprep.subr.mxu0 0.0
        %714 = vmatpush1.xpose.msra.mxu0 0.0
        %715 = vmatprep.subr.mxu0 0.0
        %716 = vmatpush1.xpose.msra.mxu0 0.0
        %717 = vmatprep.subr.mxu0 0.0
        %718 = vmatpush1.xpose.msra.mxu0 0.0
        %719 = vmatprep.subr.mxu0 0.0
        %720 = vmatpush1.xpose.msra.mxu0 0.0
        %721 = vmatprep.subr.mxu0 0.0
        %722 = vmatpush1.xpose.msra.mxu0 0.0
        %723 = vmatprep.subr.mxu0 0.0
        %724 = vmatpush1.xpose.msra.mxu0 0.0
        %725 = vmatprep.subr.mxu0 0.0
        %726 = vmatpush1.xpose.msra.mxu0 0.0
        %727 = vmatprep.subr.mxu0 0.0
        %728 = vmatpush1.xpose.msra.mxu0 0.0
        %729 = vmatprep.subr.mxu0 0.0
        %730 = vmatpush1.xpose.msra.mxu0 0.0
        %731 = vmatprep.subr.mxu0 0.0
        %732 = vmatpush1.xpose.msra.mxu0 0.0
        %733 = vmatprep.subr.mxu0 0.0
        %734 = vmatpush1.xpose.msra.mxu0 0.0
        %735 = vmatprep.subr.mxu0 0.0
        %736 = vmatpush1.xpose.msra.mxu0 0.0
        %737 = vmatprep.subr.mxu0 0.0
        %738 = vmatpush1.xpose.msra.mxu0 0.0
        %739 = vmatprep.mubr.f32.mxu0 0.0
        %740 = vmatmul.mubr.f32.gmra.mrb[0].mxu0 %v671
        %v741 = vpop.f32.mrb[0].mxu0
        %v742 = vadd.f32 0.0, %v741
        %v743 = vpop.f32.mrb[0].mxu0
        %744 = vdwg.mxu0
        %v745 = vsel %vm395, %v742, -inf
        %746 = vmax.xlane.f32.xlu0 %v745
        %v747 = vpop.xlane.xlu0 %746
        %v748 = vsub.f32 %v742, %v747
        %v749 = vmul.f32 %v748, 1.442695
        %v750 = vpow.pop %v749
        %v751 = vsel %vm395, %v750, 0.0
        %752 = vadd.xlane.f32.xlu0 %v751
        %v753 = vpop.xlane.xlu0 %752
        %v754 = vrcp.pop %v753
        %v755 = vmul.f32 %v753, %v754
        %v756 = vsub.f32 2.0, %v755
        %v757 = vmul.f32 %v754, %v756
        %v758 = vmul.f32 %v750, %v757
        %s759 = scalar_lea.vmem %s313, 16 [#allocation9]
        %760 = vst.msk [vmem:[%s759] sm:$0xff] %vm395, %v758
        %762 = vrot.lane.b32.xlu0 %v664, 64
        %v763 = vpop.permute.xlu0 %762
        %v766 = vsel %vm395, %v758, 0
        %768 = vmatprep.subr.mxu0 0.0
        %769 = vmatpush1.msra.mxu0 %v763
        %770 = vmatprep.subr.mxu0 0.0
        %771 = vmatpush1.msra.mxu0 0.0
        %772 = vmatprep.subr.mxu0 0.0
        %773 = vmatpush1.msra.mxu0 0.0
        %774 = vmatprep.subr.mxu0 0.0
        %775 = vmatpush1.msra.mxu0 0.0
        %776 = vmatprep.subr.mxu0 0.0
        %777 = vmatpush1.msra.mxu0 0.0
        %778 = vmatprep.subr.mxu0 0.0
        %779 = vmatpush1.msra.mxu0 0.0
        %780 = vmatprep.subr.mxu0 0.0
        %781 = vmatpush1.msra.mxu0 0.0
        %782 = vmatprep.subr.mxu0 0.0
        %783 = vmatpush1.msra.mxu0 0.0
        %784 = vmatprep.subr.mxu0 0.0
        %785 = vmatpush1.msra.mxu0 0.0
        %786 = vmatprep.subr.mxu0 0.0
        %787 = vmatpush1.msra.mxu0 0.0
        %788 = vmatprep.subr.mxu0 0.0
        %789 = vmatpush1.msra.mxu0 0.0
        %790 = vmatprep.subr.mxu0 0.0
        %791 = vmatpush1.msra.mxu0 0.0
        %792 = vmatprep.subr.mxu0 0.0
        %793 = vmatpush1.msra.mxu0 0.0
        %794 = vmatprep.subr.mxu0 0.0
        %795 = vmatpush1.msra.mxu0 0.0
        %796 = vmatprep.subr.mxu0 0.0
        %797 = vmatpush1.msra.mxu0 0.0
        %798 = vmatprep.subr.mxu0 0.0
        %799 = vmatpush1.msra.mxu0 0.0
        %800 = vmatprep.subr.mxu0 0.0
        %801 = vmatpush1.msra.mxu0 0.0
        %802 = vmatprep.subr.mxu0 0.0
        %803 = vmatpush1.msra.mxu0 0.0
        %804 = vmatprep.subr.mxu0 0.0
        %805 = vmatpush1.msra.mxu0 0.0
        %806 = vmatprep.subr.mxu0 0.0
        %807 = vmatpush1.msra.mxu0 0.0
        %808 = vmatprep.subr.mxu0 0.0
        %809 = vmatpush1.msra.mxu0 0.0
        %810 = vmatprep.subr.mxu0 0.0
        %811 = vmatpush1.msra.mxu0 0.0
        %812 = vmatprep.subr.mxu0 0.0
        %813 = vmatpush1.msra.mxu0 0.0
        %814 = vmatprep.subr.mxu0 0.0
        %815 = vmatpush1.msra.mxu0 0.0
        %816 = vmatprep.subr.mxu0 0.0
        %817 = vmatpush1.msra.mxu0 0.0
        %818 = vmatprep.subr.mxu0 0.0
        %819 = vmatpush1.msra.mxu0 0.0
        %820 = vmatprep.subr.mxu0 0.0
        %821 = vmatpush1.msra.mxu0 0.0
        %822 = vmatprep.subr.mxu0 0.0
        %823 = vmatpush1.msra.mxu0 0.0
        %824 = vmatprep.subr.mxu0 0.0
        %825 = vmatpush1.msra.mxu0 0.0
        %826 = vmatprep.subr.mxu0 0.0
        %827 = vmatpush1.msra.mxu0 0.0
        %828 = vmatprep.subr.mxu0 0.0
        %829 = vmatpush1.msra.mxu0 0.0
        %830 = vmatprep.subr.mxu0 0.0
        %831 = vmatpush1.msra.mxu0 0.0
        %832 = vmatprep.mubr.f32.mxu0 0.0
        %833 = vmatmul.mubr.f32.gmra.mrb[0].mxu0 %v766
        %v834 = vpop.f32.mrb[0].mxu0
        %v835 = vadd.f32 0.0, %v834
        %v836 = vpop.f32.mrb[0].mxu0
        %837 = vdwg.mxu0
        %v838 = vld [vmem:[%s256] sm:$0xff]
        %v839 = vmul.f32 %v838, 0.17677669
        %v840 = vld [vmem:[%s265] sm:$0xff]
        %v841 = vld [vmem:[%s274] sm:$0xff]
        %843 = vrot.lane.b32.xlu0 %v839, 32
        %v844 = vpop.permute.xlu0 %843
        %846 = vrot.lane.b32.xlu0 %v840, 32
        %v847 = vpop.permute.xlu0 %846
        %v848 = vsel %vm318, %v844, 0
        %v850 = vsel %vm318, %v847, 0
        %852 = vmatprep.subr.mxu0 0.0
        %853 = vmatpush1.xpose.msra.mxu0 %v850
        %854 = vmatprep.subr.mxu0 0.0
        %855 = vmatpush1.xpose.msra.mxu0 0.0
        %856 = vmatprep.subr.mxu0 0.0
        %857 = vmatpush1.xpose.msra.mxu0 0.0
        %858 = vmatprep.subr.mxu0 0.0
        %859 = vmatpush1.xpose.msra.mxu0 0.0
        %860 = vmatprep.subr.mxu0 0.0
        %861 = vmatpush1.xpose.msra.mxu0 0.0
        %862 = vmatprep.subr.mxu0 0.0
        %863 = vmatpush1.xpose.msra.mxu0 0.0
        %864 = vmatprep.subr.mxu0 0.0
        %865 = vmatpush1.xpose.msra.mxu0 0.0
        %866 = vmatprep.subr.mxu0 0.0
        %867 = vmatpush1.xpose.msra.mxu0 0.0
        %868 = vmatprep.subr.mxu0 0.0
        %869 = vmatpush1.xpose.msra.mxu0 0.0
        %870 = vmatprep.subr.mxu0 0.0
        %871 = vmatpush1.xpose.msra.mxu0 0.0
        %872 = vmatprep.subr.mxu0 0.0
        %873 = vmatpush1.xpose.msra.mxu0 0.0
        %874 = vmatprep.subr.mxu0 0.0
        %875 = vmatpush1.xpose.msra.mxu0 0.0
        %876 = vmatprep.subr.mxu0 0.0
        %877 = vmatpush1.xpose.msra.mxu0 0.0
        %878 = vmatprep.subr.mxu0 0.0
        %879 = vmatpush1.xpose.msra.mxu0 0.0
        %880 = vmatprep.subr.mxu0 0.0
        %881 = vmatpush1.xpose.msra.mxu0 0.0
        %882 = vmatprep.subr.mxu0 0.0
        %883 = vmatpush1.xpose.msra.mxu0 0.0
        %884 = vmatprep.subr.mxu0 0.0
        %885 = vmatpush1.xpose.msra.mxu0 0.0
        %886 = vmatprep.subr.mxu0 0.0
        %887 = vmatpush1.xpose.msra.mxu0 0.0
        %888 = vmatprep.subr.mxu0 0.0
        %889 = vmatpush1.xpose.msra.mxu0 0.0
        %890 = vmatprep.subr.mxu0 0.0
        %891 = vmatpush1.xpose.msra.mxu0 0.0
        %892 = vmatprep.subr.mxu0 0.0
        %893 = vmatpush1.xpose.msra.mxu0 0.0
        %894 = vmatprep.subr.mxu0 0.0
        %895 = vmatpush1.xpose.msra.mxu0 0.0
        %896 = vmatprep.subr.mxu0 0.0
        %897 = vmatpush1.xpose.msra.mxu0 0.0
        %898 = vmatprep.subr.mxu0 0.0
        %899 = vmatpush1.xpose.msra.mxu0 0.0
        %900 = vmatprep.subr.mxu0 0.0
        %901 = vmatpush1.xpose.msra.mxu0 0.0
        %902 = vmatprep.subr.mxu0 0.0
        %903 = vmatpush1.xpose.msra.mxu0 0.0
        %904 = vmatprep.subr.mxu0 0.0
        %905 = vmatpush1.xpose.msra.mxu0 0.0
        %906 = vmatprep.subr.mxu0 0.0
        %907 = vmatpush1.xpose.msra.mxu0 0.0
        %908 = vmatprep.subr.mxu0 0.0
        %909 = vmatpush1.xpose.msra.mxu0 0.0
        %910 = vmatprep.subr.mxu0 0.0
        %911 = vmatpush1.xpose.msra.mxu0 0.0
        %912 = vmatprep.subr.mxu0 0.0
        %913 = vmatpush1.xpose.msra.mxu0 0.0
        %914 = vmatprep.subr.mxu0 0.0
        %915 = vmatpush1.xpose.msra.mxu0 0.0
        %916 = vmatprep.mubr.f32.mxu0 0.0
        %917 = vmatmul.mubr.f32.gmra.mrb[0].mxu0 %v848
        %v918 = vpop.f32.mrb[0].mxu0
        %v919 = vadd.f32 0.0, %v918
        %v920 = vpop.f32.mrb[0].mxu0
        %921 = vdwg.mxu0
        %v922 = vsel %vm395, %v919, -inf
        %923 = vmax.xlane.f32.xlu0 %v922
        %v924 = vpop.xlane.xlu0 %923
        %v925 = vsub.f32 %v919, %v924
        %v926 = vmul.f32 %v925, 1.442695
        %v927 = vpow.pop %v926
        %v928 = vsel %vm395, %v927, 0.0
        %929 = vadd.xlane.f32.xlu0 %v928
        %v930 = vpop.xlane.xlu0 %929
        %v931 = vrcp.pop %v930
        %v932 = vmul.f32 %v930, %v931
        %v933 = vsub.f32 2.0, %v932
        %v934 = vmul.f32 %v931, %v933
        %v935 = vmul.f32 %v927, %v934
        %s936 = scalar_lea.vmem %s313, 24 [#allocation9]
        %937 = vst.msk [vmem:[%s936] sm:$0xff] %vm395, %v935
        %939 = vrot.lane.b32.xlu0 %v841, 32
        %v940 = vpop.permute.xlu0 %939
        %v943 = vsel %vm395, %v935, 0
        %945 = vmatprep.subr.mxu0 0.0
        %946 = vmatpush1.msra.mxu0 %v940
        %947 = vmatprep.subr.mxu0 0.0
        %948 = vmatpush1.msra.mxu0 0.0
        %949 = vmatprep.subr.mxu0 0.0
        %950 = vmatpush1.msra.mxu0 0.0
        %951 = vmatprep.subr.mxu0 0.0
        %952 = vmatpush1.msra.mxu0 0.0
        %953 = vmatprep.subr.mxu0 0.0
        %954 = vmatpush1.msra.mxu0 0.0
        %955 = vmatprep.subr.mxu0 0.0
        %956 = vmatpush1.msra.mxu0 0.0
        %957 = vmatprep.subr.mxu0 0.0
        %958 = vmatpush1.msra.mxu0 0.0
        %959 = vmatprep.subr.mxu0 0.0
        %960 = vmatpush1.msra.mxu0 0.0
        %961 = vmatprep.subr.mxu0 0.0
        %962 = vmatpush1.msra.mxu0 0.0
        %963 = vmatprep.subr.mxu0 0.0
        %964 = vmatpush1.msra.mxu0 0.0
        %965 = vmatprep.subr.mxu0 0.0
        %966 = vmatpush1.msra.mxu0 0.0
        %967 = vmatprep.subr.mxu0 0.0
        %968 = vmatpush1.msra.mxu0 0.0
        %969 = vmatprep.subr.mxu0 0.0
        %970 = vmatpush1.msra.mxu0 0.0
        %971 = vmatprep.subr.mxu0 0.0
        %972 = vmatpush1.msra.mxu0 0.0
        %973 = vmatprep.subr.mxu0 0.0
        %974 = vmatpush1.msra.mxu0 0.0
        %975 = vmatprep.subr.mxu0 0.0
        %976 = vmatpush1.msra.mxu0 0.0
        %977 = vmatprep.subr.mxu0 0.0
        %978 = vmatpush1.msra.mxu0 0.0
        %979 = vmatprep.subr.mxu0 0.0
        %980 = vmatpush1.msra.mxu0 0.0
        %981 = vmatprep.subr.mxu0 0.0
        %982 = vmatpush1.msra.mxu0 0.0
        %983 = vmatprep.subr.mxu0 0.0
        %984 = vmatpush1.msra.mxu0 0.0
        %985 = vmatprep.subr.mxu0 0.0
        %986 = vmatpush1.msra.mxu0 0.0
        %987 = vmatprep.subr.mxu0 0.0
        %988 = vmatpush1.msra.mxu0 0.0
        %989 = vmatprep.subr.mxu0 0.0
        %990 = vmatpush1.msra.mxu0 0.0
        %991 = vmatprep.subr.mxu0 0.0
        %992 = vmatpush1.msra.mxu0 0.0
        %993 = vmatprep.subr.mxu0 0.0
        %994 = vmatpush1.msra.mxu0 0.0
        %995 = vmatprep.subr.mxu0 0.0
        %996 = vmatpush1.msra.mxu0 0.0
        %997 = vmatprep.subr.mxu0 0.0
        %998 = vmatpush1.msra.mxu0 0.0
        %999 = vmatprep.subr.mxu0 0.0
        %1000 = vmatpush1.msra.mxu0 0.0
        %1001 = vmatprep.subr.mxu0 0.0
        %1002 = vmatpush1.msra.mxu0 0.0
        %1003 = vmatprep.subr.mxu0 0.0
        %1004 = vmatpush1.msra.mxu0 0.0
        %1005 = vmatprep.subr.mxu0 0.0
        %1006 = vmatpush1.msra.mxu0 0.0
        %1007 = vmatprep.subr.mxu0 0.0
        %1008 = vmatpush1.msra.mxu0 0.0
        %1009 = vmatprep.mubr.f32.mxu0 0.0
        %1010 = vmatmul.mubr.f32.gmra.mrb[0].mxu0 %v943
        %v1011 = vpop.f32.mrb[0].mxu0
        %v1012 = vadd.f32 0.0, %v1011
        %v1013 = vpop.f32.mrb[0].mxu0
        %1014 = vdwg.mxu0
        %1016 = vrot.lane.b32.xlu0 %v658, 32
        %v1017 = vpop.permute.xlu0 %1016
        %1020 = vrot.lane.b32.xlu0 %v835, 64
        %v1021 = vpop.permute.xlu0 %1020
        %1024 = vrot.lane.b32.xlu0 %v1012, 96
        %v1025 = vpop.permute.xlu0 %1024
        %v1027 = vsel %vm318, %v481, %v1017
        %vm1028 = vcmask 523264
        %v1029 = vsel %vm1028, %v1027, %v1021
        %vm1030 = vcmask 785408
        %v1031 = vsel %vm1030, %v1029, %v1025
        %1032 = vst [vmem:[%s306] sm:$0xff] %v1031
        %s1033 = sand.u32 %s130, 1
        %s1034 = scalar_lea.sflag [#allocation4], %s1033
        %s1035 = sand.u32 %s130, 1
        %s1036 = smul.addr %s1035, 8
        %s1037 = scalar_lea.vmem [#allocation8], %s1036
        %s1038 = sand.u32 %s158, 1
        %s1039 = scalar_lea.sflag [#allocation10], %s1038
        %s1040 = sand.u32 %s158, 1
        %s1041 = smul.addr %s1040, 32
        %s1042 = scalar_lea.vmem [#allocation9], %s1041
        // Predicated region
        $region45: #{tpu_custom_call.1} parent=31 // pred_check
          %p1043 = pneg %p140
        $region46: #{tpu_custom_call.1} parent=31 // pred_check_branch
          %1045 = sbr.rel (%p1043) target = $region48
        $region47: #{tpu_custom_call.1} parent=31 // pred_region
          %s1047 = ssub.s32 128, 128
          %1048 = vsyncadd %s1034, %s1047
          %s1049 = sadd.s32 %s33, %s32
          %s1050 = smul.addr %s1049, 128
          %s1051 = scalar_lea.hbm %s3, %s1050
          %s1053 = sshll.u32 %s1037, 4
          %s1054 = int_to_ptr.vmem [resolvable:$true] %s1053
          %1056 = dma.vmem_to_hbm [thread:$0]  %s1054, 128, %s1051, %s1034
        $region48: #{tpu_custom_call.1} parent=31 // pred_fallthru
          _
        // Predicated region
        $region49: #{tpu_custom_call.1} parent=31 // pred_check
          %p1057 = pneg %p168
        $region50: #{tpu_custom_call.1} parent=31 // pred_check_branch
          %1059 = sbr.rel (%p1057) target = $region52
        $region51: #{tpu_custom_call.1} parent=31 // pred_region
          %s1061 = ssub.s32 512, 512
          %1062 = vsyncadd %s1039, %s1061
          %s1063 = smul.addr %s32, 4
          %s1064 = sadd.s32 %s33, %s1063
          %s1065 = smul.addr %s1064, 128
          %s1066 = scalar_lea.hbm %s4, %s1065
          %s1067 = sshll.u32 %s1042, 4
          %s1068 = int_to_ptr.vmem [resolvable:$true] %s1067
          %1073 = dma.vmem_to_hbm [thread:$0]  %s1068, 512, %s1066, %s1039, 128, 128, 8
        $region52: #{tpu_custom_call.1} parent=31 // pred_fallthru
          _
      $region32: #{tpu_custom_call.1} parent=5 // pred_fallthru
        _
      %p1074 = scmp.le.s32.totalorder 2, %s23
      // Predicated region
      $region53: #{tpu_custom_call.1} parent=5 // pred_check
        %p1075 = pneg %p1074
      $region54: #{tpu_custom_call.1} parent=5 // pred_check_branch
        %1077 = sbr.rel (%p1075) target = $region56
      $region55: #{tpu_custom_call.1} parent=5 // pred_region
        %s1078 = ssub.s32 %s23, 2
        // Predicated region
        $region57: #{tpu_custom_call.1} parent=55 // pred_check
          %p1079 = pneg %p146
        $region58: #{tpu_custom_call.1} parent=55 // pred_check_branch
          %1081 = sbr.rel (%p1079) target = $region60
        $region59: #{tpu_custom_call.1} parent=55 // pred_region
          %s1082 = sand.u32 %s131, 1
          %s1083 = scalar_lea.sflag [#allocation4], %s1082
          %s1084 = sand.u32 %s131, 1
          %s1085 = smul.addr %s1084, 8
          %s1086 = scalar_lea.vmem [#allocation8], %s1085
          %1087 = dma.done %s1083, 128
        $region60: #{tpu_custom_call.1} parent=55 // pred_fallthru
          _
        // Predicated region
        $region61: #{tpu_custom_call.1} parent=55 // pred_check
          %p1088 = pneg %p174
        $region62: #{tpu_custom_call.1} parent=55 // pred_check_branch
          %1090 = sbr.rel (%p1088) target = $region64
        $region63: #{tpu_custom_call.1} parent=55 // pred_region
          %s1091 = sand.u32 %s159, 1
          %s1092 = scalar_lea.sflag [#allocation10], %s1091
          %s1093 = sand.u32 %s159, 1
          %s1094 = smul.addr %s1093, 32
          %s1095 = scalar_lea.vmem [#allocation9], %s1094
          %1096 = dma.done %s1092, 512
        $region64: #{tpu_custom_call.1} parent=55 // pred_fallthru
          _
      $region56: #{tpu_custom_call.1} parent=5 // pred_fallthru
        _
    $region6: #{tpu_custom_call.1} parent=1 // loop_footer
      %s27 = sadd.s32 1, %s23
    $region7: #{tpu_custom_call.1} parent=1 // loop_footer_branch
      %22 = sbr.rel target = $region3
    $region8: #{tpu_custom_call.1} parent=1 // loop_exit
      _
    %1097 = vsyncpa [#allocation3], 1
    %s1098 = scalar_lea.sflag [#allocation3], 1
    %1099 = vsyncpa %s1098, 1
    %1100 = vsyncpa [#allocation6], 1
    %s1101 = scalar_lea.sflag [#allocation6], 1
    %1102 = vsyncpa %s1101, 1
    %1103 = vsyncpa [#allocation4], 1
    %s1104 = scalar_lea.sflag [#allocation4], 1
    %1105 = vsyncpa %s1104, 1
    %1106 = vsyncpa [#allocation10], 1
    %s1107 = scalar_lea.sflag [#allocation10], 1
    %1108 = vsyncpa %s1107, 1

</llo_original>
